<compile_context>
chip_gen: v5e
topology: v5e:2x2
jax: 0.10.0
libtpu: 0.0.40
codegen_flags: <defaults>
</compile_context>

<pallas_src>
import functools

import numpy as np
import jax
import jax.numpy as jnp
from jax.experimental import pallas as pl
from jax.experimental.pallas import tpu as pltpu

SLOPE = 0.2  # LeakyReLU negative slope used throughout the module


# ----------------------------------------------------------------------------
# Fused kernel: depth-conv x2 -> 1x1 conv -> LeakyReLU -> softmax over batch
# ----------------------------------------------------------------------------
def _fused_kernel(w3a_ref, b3a_ref, w3b_ref, b3b_ref, wbig_ref, b2_ref,
                  mfirst_ref, mlast_ref, x_ref, o_ref, *, slope, n_batch, out_c):
    R = x_ref.shape[0]                 # R = B*C rows, pixels lane-dense on axis 1

    # Hoisted per-row masks that zero the depth-conv halo where the (3,1,1)
    # kernel's zero padding applies (also stops roll leaking across images).
    mfirst = mfirst_ref[...]           # (R, 1): 0.0 at channel 0 rows, else 1.0
    mlast = mlast_ref[...]             # (R, 1): 0.0 at channel C-1 rows, else 1.0

    def depth_conv3(h, w_ref, b_ref):
        # Conv3d(1, 1, kernel=(3,1,1), padding=(1,0,0)) along the channel axis:
        #   out[d] = w0*h[d-1] + w1*h[d] + w2*h[d+1] + b   (zero padded)
        hm = pltpu.roll(h, 1, axis=0) * mfirst        # h[d-1] (masked at d==0)
        hp = pltpu.roll(h, R - 1, axis=0) * mlast     # h[d+1] (masked at d==C-1)
        y = w_ref[0] * hm + w_ref[1] * h + w_ref[2] * hp + b_ref[0]
        return jnp.where(y > 0, y, slope * y)         # LeakyReLU(0.2)

    h = depth_conv3(x_ref[...], w3a_ref, b3a_ref)
    h = depth_conv3(h, w3b_ref, b3b_ref)

    # 1x1 Conv2d over channels for the WHOLE batch at once: block-diagonal
    # weight (B*OC, B*C) @ (B*C, PB) -> (B*OC, PB). Single MXU issue per step.
    y = jnp.dot(wbig_ref[...], h, preferred_element_type=jnp.float32)
    y = y + b2_ref[...]                               # (B*OC, 1) lane-broadcast
    y = jnp.where(y > 0, y, slope * y)                # LeakyReLU(0.2)

    # Softmax over dim 0 (the batch axis): for output row r = b*OC + oc the
    # reduction set is {b'*OC + oc}, enumerated by cyclic sublane rolls of OC.
    m = y
    for b in range(1, n_batch):
        m = jnp.maximum(m, pltpu.roll(y, b * out_c, axis=0))
    e = jnp.exp(y - m)
    s = e
    for b in range(1, n_batch):
        s = s + pltpu.roll(e, b * out_c, axis=0)
    o_ref[...] = e * pl.reciprocal(s, approx=True)


# ----------------------------------------------------------------------------
# Pixel-block selection: big lane-dense blocks, VMEM-budgeted, >=2 grid steps
# ----------------------------------------------------------------------------
def _choose_pixel_block(P, R, RO, *, max_pb=2048, vmem_budget=20 * 1024 * 1024):
    p128 = ((P + 127) // 128) * 128
    # Rough per-lane f32 footprint: double-buffered x block + a few live copies
    # of h / rolled temporaries + y/e/s.  Keeps us well inside v7x's 32 MiB
    # scoped / 64 MiB physical VMEM.
    bytes_per_lane = 4 * (8 * R + 6 * RO)
    cap = max(128, (vmem_budget // bytes_per_lane) // 128 * 128)
    pb = max(128, min(max_pb, cap, p128))
    # Keep at least 2 grid steps when possible so v7x megacore can split the
    # "parallel" pixel axis across its two TensorCores.
    if pb == p128 and p128 >= 256:
        pb = max(128, ((p128 // 2) // 128) * 128)
    return pb


# ----------------------------------------------------------------------------
# Host wrapper: one fused pallas_call for the whole forward pass
# ----------------------------------------------------------------------------
def my_lr_2_forward(x_nchw, params, *, max_pixel_block=2048):
    B, C, H, W = x_nchw.shape
    P = H * W
    OC = params["w2d"].shape[0]
    R, RO = B * C, B * OC

    pb = _choose_pixel_block(P, R, RO, max_pb=max_pixel_block)
    P_pad = ((P + pb - 1) // pb) * pb
    grid = (P_pad // pb,)

    x2 = x_nchw.reshape(R, P)                       # NCHW -> (B*C, H*W), free
    if P_pad != P:
        x2 = jnp.pad(x2, ((0, 0), (0, P_pad - P)))  # lane-dense 128-multiple

    # Block-diagonal 1x1-conv weight so one matmul serves the whole batch.
    wbig = jnp.kron(jnp.eye(B, dtype=jnp.float32), params["w2d"])   # (B*OC, B*C)
    b2 = jnp.tile(params["b2d"], B).reshape(RO, 1)                  # (B*OC, 1)

    # Per-row halo masks (row = b*C + c): zero at c==0 / c==C-1 respectively.
    cid = np.arange(R) % C
    mfirst = jnp.asarray((cid != 0).astype(np.float32).reshape(R, 1))
    mlast = jnp.asarray((cid != C - 1).astype(np.float32).reshape(R, 1))

    kern = functools.partial(_fused_kernel, slope=SLOPE, n_batch=B, out_c=OC)
    out = pl.pallas_call(
        kern,
        out_shape=jax.ShapeDtypeStruct((RO, P_pad), jnp.float32),
        grid=grid,
        in_specs=[
            pl.BlockSpec(memory_space=pltpu.MemorySpace.SMEM),   # w3d_1 (3,)
            pl.BlockSpec(memory_space=pltpu.MemorySpace.SMEM),   # b3d_1 (1,)
            pl.BlockSpec(memory_space=pltpu.MemorySpace.SMEM),   # w3d_2 (3,)
            pl.BlockSpec(memory_space=pltpu.MemorySpace.SMEM),   # b3d_2 (1,)
            pl.BlockSpec((RO, R), lambda i: (0, 0)),             # wbig
            pl.BlockSpec((RO, 1), lambda i: (0, 0)),             # b2
            pl.BlockSpec((R, 1), lambda i: (0, 0)),              # mask first
            pl.BlockSpec((R, 1), lambda i: (0, 0)),              # mask last
            pl.BlockSpec((R, pb), lambda i: (0, i)),             # x  (B*C, P)
        ],
        out_specs=pl.BlockSpec((RO, pb), lambda i: (0, i)),      # (B*OC, P)
        compiler_params=pltpu.CompilerParams(
            dimension_semantics=("parallel",)),
    )(params["w3d_1"], params["b3d_1"], params["w3d_2"], params["b3d_2"],
      wbig, b2, mfirst, mlast, x2)

    return out[:, :P].reshape(B, OC, H, W)


# ----------------------------------------------------------------------------
# Parameters + pure-JAX reference (for a sanity check)
# ----------------------------------------------------------------------------
def init_params(key, output_c, ngf):
    C = ngf * 4
    ks = jax.random.split(key, 6)
    s = 0.1
    return {
        # Conv3DBlock(in=1, mid=1, kernel=(3,1,1), pad=(1,0,0)): two depth convs
        "w3d_1": s * jax.random.normal(ks[0], (3,), jnp.float32),
        "b3d_1": s * jax.random.normal(ks[1], (1,), jnp.float32),
        "w3d_2": s * jax.random.normal(ks[2], (3,), jnp.float32),
        "b3d_2": s * jax.random.normal(ks[3], (1,), jnp.float32),
        # nn.Conv2d(ngf*4, output_c, 1, 1, 0): weight in (out_c, in_c) layout
        "w2d": s * jax.random.normal(ks[4], (output_c, C), jnp.float32),
        "b2d": s * jax.random.normal(ks[5], (output_c,), jnp.float32),
    }


def reference_forward(x, params):
    B, C, H, W = x.shape

    def dconv(h, w, b):
        zero = jnp.zeros((B, 1, H, W), jnp.float32)
        hm = jnp.concatenate([zero, h[:, :-1]], axis=1)
        hp = jnp.concatenate([h[:, 1:], zero], axis=1)
        y = w[0] * hm + w[1] * h + w[2] * hp + b[0]
        return jnp.where(y > 0, y, SLOPE * y)

    h = dconv(x, params["w3d_1"], params["b3d_1"])
    h = dconv(h, params["w3d_2"], params["b3d_2"])
    y = jnp.einsum("oc,bchw->bohw", params["w2d"], h)
    y = y + params["b2d"][None, :, None, None]
    y = jnp.where(y > 0, y, SLOPE * y)
    return jax.nn.softmax(y, axis=0)


if __name__ == "__main__":
    output_c, ngf = 4, 4
    B, H, W = 2, 16, 16
    C = ngf * 4                                     # input channels = ngf*4 = 16

    key = jax.random.PRNGKey(0)
    kx, kp = jax.random.split(key)
    x = jax.random.normal(kx, (B, C, H, W), jnp.float32)
    params = init_params(kp, output_c, ngf)

    fwd = jax.jit(my_lr_2_forward)
    out = fwd(x, params)
    jax.block_until_ready(out)
    assert out.shape == (B, output_c, H, W), out.shape

    ref = reference_forward(x, params)
    max_err = float(jnp.max(jnp.abs(out - ref)))
    # tolerance loosened slightly vs 1e-4 to cover pl.reciprocal(approx=True)
    assert jnp.allclose(out, ref, rtol=1e-3, atol=1e-3), max_err
    print("KERNEL_OK")
</pallas_src>

<mosaic_0001>
module attributes {stable_mosaic.version = 11 : i64} {
  func.func @_fused_kernel(%arg0: i32, %arg1: memref<3xf32, #tpu.memory_space<smem>>, %arg2: memref<1xf32, #tpu.memory_space<smem>>, %arg3: memref<3xf32, #tpu.memory_space<smem>>, %arg4: memref<1xf32, #tpu.memory_space<smem>>, %arg5: memref<8x32xf32, #tpu.memory_space<vmem>>, %arg6: memref<8x1xf32, #tpu.memory_space<vmem>>, %arg7: memref<32x1xf32, #tpu.memory_space<vmem>>, %arg8: memref<32x1xf32, #tpu.memory_space<vmem>>, %arg9: memref<32x128xf32, #tpu.memory_space<vmem>>, %arg10: memref<8x128xf32, #tpu.memory_space<vmem>>) attributes {dimension_semantics = [#tpu.dimension_semantics<parallel>], iteration_bounds = array<i64: 2>, scalar_prefetch = 0 : i64, scratch_operands = 0 : i64, tpu.core_type = #tpu.core_type<tc>, window_params = [{transform_indices = @transform_0, window_bounds = array<i64: 3>}, {transform_indices = @transform_1, window_bounds = array<i64: 1>}, {transform_indices = @transform_2, window_bounds = array<i64: 3>}, {transform_indices = @transform_3, window_bounds = array<i64: 1>}, {pipeline_mode = #tpu.pipeline_mode<synchronous>, transform_indices = @transform_4, window_bounds = array<i64: 8, 32>}, {pipeline_mode = #tpu.pipeline_mode<synchronous>, transform_indices = @transform_5, window_bounds = array<i64: 8, 1>}, {pipeline_mode = #tpu.pipeline_mode<synchronous>, transform_indices = @transform_6, window_bounds = array<i64: 32, 1>}, {pipeline_mode = #tpu.pipeline_mode<synchronous>, transform_indices = @transform_7, window_bounds = array<i64: 32, 1>}, {transform_indices = @transform_8, window_bounds = array<i64: 32, 128>}, {transform_indices = @transform_9, window_bounds = array<i64: 8, 128>}]} {
    %c0 = arith.constant 0 : index
    %c0_0 = arith.constant 0 : index
    %0 = vector.load %arg7[%c0, %c0_0] : memref<32x1xf32, #tpu.memory_space<vmem>>, vector<32x1xf32>
    %c0_1 = arith.constant 0 : index
    %c0_2 = arith.constant 0 : index
    %1 = vector.load %arg8[%c0_1, %c0_2] : memref<32x1xf32, #tpu.memory_space<vmem>>, vector<32x1xf32>
    %c0_3 = arith.constant 0 : index
    %c0_4 = arith.constant 0 : index
    %2 = vector.load %arg9[%c0_3, %c0_4] : memref<32x128xf32, #tpu.memory_space<vmem>>, vector<32x128xf32>
    %c1_i32 = arith.constant 1 : i32
    %3 = tpu.dynamic_rotate %2 by %c1_i32 dim 0 : vector<32x128xf32>, i32 -> vector<32x128xf32>
    %4 = vector.broadcast %0 : vector<32x1xf32> to vector<32x128xf32>
    %5 = arith.mulf %3, %4 : vector<32x128xf32>
    %c31_i32 = arith.constant 31 : i32
    %6 = tpu.dynamic_rotate %2 by %c31_i32 dim 0 : vector<32x128xf32>, i32 -> vector<32x128xf32>
    %7 = vector.broadcast %1 : vector<32x1xf32> to vector<32x128xf32>
    %8 = arith.mulf %6, %7 : vector<32x128xf32>
    %c0_5 = arith.constant 0 : index
    %9 = memref.load %arg1[%c0_5] : memref<3xf32, #tpu.memory_space<smem>>
    %10 = vector.broadcast %9 : f32 to vector<32x128xf32>
    %11 = arith.mulf %10, %5 : vector<32x128xf32>
    %c1 = arith.constant 1 : index
    %12 = memref.load %arg1[%c1] : memref<3xf32, #tpu.memory_space<smem>>
    %13 = vector.broadcast %12 : f32 to vector<32x128xf32>
    %14 = arith.mulf %13, %2 : vector<32x128xf32>
    %15 = arith.addf %11, %14 : vector<32x128xf32>
    %c2 = arith.constant 2 : index
    %16 = memref.load %arg1[%c2] : memref<3xf32, #tpu.memory_space<smem>>
    %17 = vector.broadcast %16 : f32 to vector<32x128xf32>
    %18 = arith.mulf %17, %8 : vector<32x128xf32>
    %19 = arith.addf %15, %18 : vector<32x128xf32>
    %c0_6 = arith.constant 0 : index
    %20 = memref.load %arg2[%c0_6] : memref<1xf32, #tpu.memory_space<smem>>
    %21 = vector.broadcast %20 : f32 to vector<32x128xf32>
    %22 = arith.addf %19, %21 : vector<32x128xf32>
    %cst = arith.constant 0.000000e+00 : f32
    %23 = vector.broadcast %cst : f32 to vector<32x128xf32>
    %24 = arith.cmpf ogt, %22, %23 : vector<32x128xf32>
    %cst_7 = arith.constant 2.000000e-01 : f32
    %25 = vector.broadcast %cst_7 : f32 to vector<32x128xf32>
    %26 = arith.mulf %25, %22 : vector<32x128xf32>
    %27 = arith.select %24, %22, %26 : vector<32x128xi1>, vector<32x128xf32>
    %c1_i32_8 = arith.constant 1 : i32
    %28 = tpu.dynamic_rotate %27 by %c1_i32_8 dim 0 : vector<32x128xf32>, i32 -> vector<32x128xf32>
    %29 = vector.broadcast %0 : vector<32x1xf32> to vector<32x128xf32>
    %30 = arith.mulf %28, %29 : vector<32x128xf32>
    %c31_i32_9 = arith.constant 31 : i32
    %31 = tpu.dynamic_rotate %27 by %c31_i32_9 dim 0 : vector<32x128xf32>, i32 -> vector<32x128xf32>
    %32 = vector.broadcast %1 : vector<32x1xf32> to vector<32x128xf32>
    %33 = arith.mulf %31, %32 : vector<32x128xf32>
    %c0_10 = arith.constant 0 : index
    %34 = memref.load %arg3[%c0_10] : memref<3xf32, #tpu.memory_space<smem>>
    %35 = vector.broadcast %34 : f32 to vector<32x128xf32>
    %36 = arith.mulf %35, %30 : vector<32x128xf32>
    %c1_11 = arith.constant 1 : index
    %37 = memref.load %arg3[%c1_11] : memref<3xf32, #tpu.memory_space<smem>>
    %38 = vector.broadcast %37 : f32 to vector<32x128xf32>
    %39 = arith.mulf %38, %27 : vector<32x128xf32>
    %40 = arith.addf %36, %39 : vector<32x128xf32>
    %c2_12 = arith.constant 2 : index
    %41 = memref.load %arg3[%c2_12] : memref<3xf32, #tpu.memory_space<smem>>
    %42 = vector.broadcast %41 : f32 to vector<32x128xf32>
    %43 = arith.mulf %42, %33 : vector<32x128xf32>
    %44 = arith.addf %40, %43 : vector<32x128xf32>
    %c0_13 = arith.constant 0 : index
    %45 = memref.load %arg4[%c0_13] : memref<1xf32, #tpu.memory_space<smem>>
    %46 = vector.broadcast %45 : f32 to vector<32x128xf32>
    %47 = arith.addf %44, %46 : vector<32x128xf32>
    %cst_14 = arith.constant 0.000000e+00 : f32
    %48 = vector.broadcast %cst_14 : f32 to vector<32x128xf32>
    %49 = arith.cmpf ogt, %47, %48 : vector<32x128xf32>
    %cst_15 = arith.constant 2.000000e-01 : f32
    %50 = vector.broadcast %cst_15 : f32 to vector<32x128xf32>
    %51 = arith.mulf %50, %47 : vector<32x128xf32>
    %52 = arith.select %49, %47, %51 : vector<32x128xi1>, vector<32x128xf32>
    %c0_16 = arith.constant 0 : index
    %c0_17 = arith.constant 0 : index
    %53 = vector.load %arg5[%c0_16, %c0_17] : memref<8x32xf32, #tpu.memory_space<vmem>>, vector<8x32xf32>
    %cst_18 = arith.constant dense<0.000000e+00> : vector<8x128xf32>
    %54 = tpu.matmul %53, %52, %cst_18 {dimension_numbers = #tpu.dot_dimension_numbers<[1], [0], [0], [1], [0, 0, 1, 1], [], []>} : vector<8x32xf32>, vector<32x128xf32>, vector<8x128xf32> -> vector<8x128xf32>
    %c0_19 = arith.constant 0 : index
    %c0_20 = arith.constant 0 : index
    %55 = vector.load %arg6[%c0_19, %c0_20] : memref<8x1xf32, #tpu.memory_space<vmem>>, vector<8x1xf32>
    %56 = vector.broadcast %55 : vector<8x1xf32> to vector<8x128xf32>
    %57 = arith.addf %54, %56 : vector<8x128xf32>
    %cst_21 = arith.constant 0.000000e+00 : f32
    %58 = vector.broadcast %cst_21 : f32 to vector<8x128xf32>
    %59 = arith.cmpf ogt, %57, %58 : vector<8x128xf32>
    %cst_22 = arith.constant 2.000000e-01 : f32
    %60 = vector.broadcast %cst_22 : f32 to vector<8x128xf32>
    %61 = arith.mulf %60, %57 : vector<8x128xf32>
    %62 = arith.select %59, %57, %61 : vector<8x128xi1>, vector<8x128xf32>
    %c4_i32 = arith.constant 4 : i32
    %63 = tpu.dynamic_rotate %62 by %c4_i32 dim 0 : vector<8x128xf32>, i32 -> vector<8x128xf32>
    %64 = arith.maximumf %62, %63 : vector<8x128xf32>
    %65 = arith.subf %62, %64 : vector<8x128xf32>
    %66 = math.exp %65 : vector<8x128xf32>
    %c4_i32_23 = arith.constant 4 : i32
    %67 = tpu.dynamic_rotate %66 by %c4_i32_23 dim 0 : vector<8x128xf32>, i32 -> vector<8x128xf32>
    %68 = arith.addf %66, %67 : vector<8x128xf32>
    %69 = tpu.reciprocal %68 {approx = true} : vector<8x128xf32> -> vector<8x128xf32>
    %70 = arith.mulf %66, %69 : vector<8x128xf32>
    %c0_24 = arith.constant 0 : index
    %c0_25 = arith.constant 0 : index
    %71 = vector.load %arg10[%c0_24, %c0_25] : memref<8x128xf32, #tpu.memory_space<vmem>>, vector<8x128xf32>
    tpu.vector_store %arg10[%c0_24, %c0_25], %70 {strides = array<i32>} : memref<8x128xf32, #tpu.memory_space<vmem>>, vector<8x128xf32>,
    return
  }
  func.func @transform_0(%arg0: i32) -> i32 {
    %c0_i32 = arith.constant 0 : i32
    %c0_i32_0 = arith.constant 0 : i32
    return %c0_i32 : i32
  }
  func.func @transform_1(%arg0: i32) -> i32 {
    %c0_i32 = arith.constant 0 : i32
    %c0_i32_0 = arith.constant 0 : i32
    return %c0_i32 : i32
  }
  func.func @transform_2(%arg0: i32) -> i32 {
    %c0_i32 = arith.constant 0 : i32
    %c0_i32_0 = arith.constant 0 : i32
    return %c0_i32 : i32
  }
  func.func @transform_3(%arg0: i32) -> i32 {
    %c0_i32 = arith.constant 0 : i32
    %c0_i32_0 = arith.constant 0 : i32
    return %c0_i32 : i32
  }
  func.func @transform_4(%arg0: i32) -> (i32, i32) {
    %c0_i32 = arith.constant 0 : i32
    %c0_i32_0 = arith.constant 0 : i32
    %c0_i32_1 = arith.constant 0 : i32
    return %c0_i32, %c0_i32_0 : i32, i32
  }
  func.func @transform_5(%arg0: i32) -> (i32, i32) {
    %c0_i32 = arith.constant 0 : i32
    %c0_i32_0 = arith.constant 0 : i32
    %c0_i32_1 = arith.constant 0 : i32
    return %c0_i32, %c0_i32_0 : i32, i32
  }
  func.func @transform_6(%arg0: i32) -> (i32, i32) {
    %c0_i32 = arith.constant 0 : i32
    %c0_i32_0 = arith.constant 0 : i32
    %c0_i32_1 = arith.constant 0 : i32
    return %c0_i32, %c0_i32_0 : i32, i32
  }
  func.func @transform_7(%arg0: i32) -> (i32, i32) {
    %c0_i32 = arith.constant 0 : i32
    %c0_i32_0 = arith.constant 0 : i32
    %c0_i32_1 = arith.constant 0 : i32
    return %c0_i32, %c0_i32_0 : i32, i32
  }
  func.func @transform_8(%arg0: i32) -> (i32, i32) {
    %c0_i32 = arith.constant 0 : i32
    %c0_i32_0 = arith.constant 0 : i32
    return %c0_i32, %arg0 : i32, i32
  }
  func.func @transform_9(%arg0: i32) -> (i32, i32) {
    %c0_i32 = arith.constant 0 : i32
    %c0_i32_0 = arith.constant 0 : i32
    return %c0_i32, %arg0 : i32, i32
  }
}

</mosaic_0001>

<llo_original>
// kernel: tile.8
$region0: #{tile.8}
  #allocation0 [shape = 's32[1]{0}', space=sflag, size = 0x4, scoped, tag = 'scoped memory for tile.8']
  %s0 = inlined_call_operand.vmem [shape: f32[4], index: 0, kind: input, shape index: {}]
  %s1 = inlined_call_operand.vmem [shape: f32[2,4], index: 1, kind: output, shape index: {}]
  // Predicated region
  $region2: #{tile.8} parent=0 // pred_check
    _
  $region3: #{tile.8} parent=0 // pred_check_branch
    %3 = sbr.rel (0) target = $region5
  $region4: #{tile.8} parent=0 // pred_region
    _
  $region5: #{tile.8} parent=0 // pred_fallthru
    _
  %v4 = vld [vmem:[%s0] ss:$0 sm:$0xff]
  %5 = vst [vmem:[%s1] sm:$0x3] %v4

// kernel: tile.0
$region0: #{tile.0}
  %s0 = inlined_call_operand.vmem [shape: f32[2,4], index: 0, kind: input, shape index: {}]
  %s1 = inlined_call_operand.vmem [shape: f32[8,1], index: 1, kind: output, shape index: {}]
  $region1: #{tile.0} parent=0
    #allocation0 [shape = 'u8[4096]{0}', space=vmem, size = 0x1000, scoped, tag = 'scoped mem for input reshape']
    %s3 = ssub.s32 4, 1
    %v4 = vld [vmem:[%s0] sm:%s3]
    %5 = vst [vmem:[#allocation0] sm:%s3] %v4
    %v6 = vld [vmem:[#allocation0] sm:$0x3]
    %vm7 = vcmask 7168
    %8 = vst.msk [vmem:[%s1] ss:$4 sm:$0x3] %vm7, %v6
    %v9 = vld [vmem:[#allocation0] sm:$0x3]
    %10 = vrot.lane.b32.xlu0 %v9, 127
    %v11 = vpop.permute.xlu0 %10
    %vm12 = vcmask 7168
    %s13 = scalar_lea.vmem %s1, 1
    %14 = vst.msk [vmem:[%s13] ss:$4 sm:$0x3] %vm12, %v11
    %v15 = vld [vmem:[#allocation0] sm:$0x3]
    %16 = vrot.lane.b32.xlu0 %v15, 126
    %v17 = vpop.permute.xlu0 %16
    %vm18 = vcmask 7168
    %s19 = scalar_lea.vmem %s1, 2
    %20 = vst.msk [vmem:[%s19] ss:$4 sm:$0x3] %vm18, %v17
    %v21 = vld [vmem:[#allocation0] sm:$0x3]
    %22 = vrot.lane.b32.xlu0 %v21, 125
    %v23 = vpop.permute.xlu0 %22
    %vm24 = vcmask 7168
    %s25 = scalar_lea.vmem %s1, 3
    %26 = vst.msk [vmem:[%s25] ss:$4 sm:$0x3] %vm24, %v23

// kernel: my_lr_2_forward.1
$region0: #{my_lr_2_forward.1}
  #allocation0 [shape = 'u32[]', space=smem, size = 0x4, offset = 0x4, fixed_abs, tag = 'smem constant byte address 0x4 - core index']
  #allocation1 [shape = 'u32[72,128]{1,0:T(1,128)}', space=vmem, size = 0x9000, scoped, tag = 'internal scratch']
  #allocation2 [shape = 'f32[1]{0:T(128)S(6)}', space=smem, size = 0x200, scoped, tag = 'scoped memory for my_lr_2_forward.1']
  #allocation3 [shape = 'f32[1]{0:T(128)S(6)}', space=smem, size = 0x200, scoped, tag = 'scoped memory for my_lr_2_forward.1']
  %s0 = inlined_call_operand.vmem [shape: f32[3], index: 0, kind: input, shape index: {}]
  %s1 = inlined_call_operand.<no memory space> [shape: f32[1], index: 1, kind: input, shape index: {}]
  %s2 = inlined_call_operand.vmem [shape: f32[3], index: 2, kind: input, shape index: {}]
  %s3 = inlined_call_operand.<no memory space> [shape: f32[1], index: 3, kind: input, shape index: {}]
  %s4 = inlined_call_operand.vmem [shape: f32[8,32], index: 4, kind: input, shape index: {}]
  %s5 = inlined_call_operand.vmem [shape: f32[8,1], index: 5, kind: input, shape index: {}]
  %s6 = inlined_call_operand.vmem [shape: f32[32,1], index: 6, kind: input, shape index: {}]
  %s7 = inlined_call_operand.vmem [shape: f32[32,1], index: 7, kind: input, shape index: {}]
  %s8 = inlined_call_operand.vmem [shape: f32[32,256], index: 8, kind: input, shape index: {}]
  %s9 = inlined_call_operand.vmem [shape: f32[8,256], index: 9, kind: output, shape index: {}]
  %s10 = sld [smem:[#allocation0]]
  $region115: #{my_lr_2_forward.1} parent=0
    _
  %s12 = ssub.s32 1, %s10
  %s13 = scalar_select 0, %s12, %s10
  %14 = sst [smem:[#allocation2]] %s1
  %15 = sst [smem:[#allocation3]] %s3
  $region1: #{my_lr_2_forward.1} parent=0
    #allocation4 [shape = 'u8[512]{0}', space=smem, size = 0x200, scoped, tag = 'input window, operand 0, single buffered']
    #allocation5 [shape = 's32[2]{0}', space=sflag, size = 0x8, scoped, tag = 'scoped memory for my_lr_2_forward.1']
    #allocation6 [shape = 'u8[512]{0}', space=smem, size = 0x200, scoped, tag = 'input window, operand 2, single buffered']
    #allocation7 [shape = 's32[1]{0}', space=sflag, size = 0x4, scoped, tag = 'scoped memory for my_lr_2_forward.1']
    #allocation8 [shape = 'u8[32768]{0}', space=vmem, size = 0x8000, scoped, tag = 'input window, operand 8']
    %16 = vsyncpa [#allocation5], 0
    %17 = vsyncpa [#allocation7], 0
    loop: start=0, step=1, limit=4
    $region2: #{my_lr_2_forward.1} parent=1 // loop_pre_header
      _
    $region3: #{my_lr_2_forward.1} parent=1 // loop_header
      %s19 = sphi 0, %s23
      %p20 = scmp.ge.s32.totalorder %s19, 4
      %s27 = sphi 0, %s27
      %s29 = sphi 0, %s27
      %s30 = sphi 0, %s29
      %s44 = sphi 0, %s30
      %s48 = sphi 0, %s48
      %s50 = sphi 0, %s48
      %s51 = sphi 0, %s50
      %s65 = sphi 0, %s51
      %s69 = sphi 0, %s69
      %s71 = sphi 0, %s69
      %s72 = sphi 0, %s71
      %s86 = sphi 0, %s72
      %s90 = sphi 0, %s90
      %s92 = sphi 0, %s90
      %s93 = sphi 0, %s92
      %s107 = sphi 0, %s93
      %s111 = sphi 0, %s111
      %s113 = sphi 0, %s111
      %s114 = sphi 0, %s113
      %s128 = sphi 0, %s114
      %s132 = sphi 0, %s132
      %s134 = sphi 0, %s132
      %s135 = sphi 0, %s134
      %s149 = sphi 0, %s135
      %s153 = sphi 0, %s153
      %s155 = sphi 0, %s153
      %s156 = sphi 0, %s155
      %s170 = sphi 0, %s156
      %s174 = sphi 0, %s174
      %s176 = sphi 0, %s174
      %s177 = sphi 0, %s176
      %s191 = sphi 0, %s177
      %s197 = sphi 0, %s199
      %s200 = sphi 0, %s197
      %s201 = sphi 0, %s200
      %s217 = sphi 0, %s201
      %s223 = sphi 0, %s225
      %s226 = sphi 0, %s223
      %s227 = sphi 0, %s226
      %s243 = sphi 0, %s227
    $region4: #{my_lr_2_forward.1} parent=1 // loop_header_branch
      %22 = sbr.rel (%p20) target = $region8
    $region5: #{my_lr_2_forward.1} parent=1 // loop_body
      %s24 = ssub.s32 %s19, 1
      %s25 = ssub.s32 %s19, 2
      %s26 = sadd.s32 %s19, 1
      %s28 = sadd.s32 %s27, 1
      %p31 = scmp.eq.s32.totalorder %s19, 1
      %p32 = scmp.ne.s32.totalorder %s27, %s29
      %p33 = scmp.eq.s32.totalorder %s19, 0
      %p34 = por %p32, %p33
      %p35 = scmp.ne.s32.totalorder %s27, %s29
      %p36 = scmp.eq.s32.totalorder %s24, 1
      %p37 = por %p35, %p36
      %p38 = scmp.ne.s32.totalorder %s29, %s30
      %p39 = scmp.eq.s32.totalorder %s24, 0
      %p40 = por %p38, %p39
      %p41 = scmp.ne.s32.totalorder %s29, %s30
      %p42 = scmp.eq.s32.totalorder %s25, 1
      %p43 = por %p41, %p42
      %p45 = scmp.ne.s32.totalorder %s30, %s44
      %p46 = scmp.eq.s32.totalorder %s25, 0
      %p47 = por %p45, %p46
      %s49 = sadd.s32 %s48, 1
      %p52 = scmp.eq.s32.totalorder %s19, 1
      %p53 = scmp.ne.s32.totalorder %s48, %s50
      %p54 = scmp.eq.s32.totalorder %s19, 0
      %p55 = por %p53, %p54
      %p56 = scmp.ne.s32.totalorder %s48, %s50
      %p57 = scmp.eq.s32.totalorder %s24, 1
      %p58 = por %p56, %p57
      %p59 = scmp.ne.s32.totalorder %s50, %s51
      %p60 = scmp.eq.s32.totalorder %s24, 0
      %p61 = por %p59, %p60
      %p62 = scmp.ne.s32.totalorder %s50, %s51
      %p63 = scmp.eq.s32.totalorder %s25, 1
      %p64 = por %p62, %p63
      %p66 = scmp.ne.s32.totalorder %s51, %s65
      %p67 = scmp.eq.s32.totalorder %s25, 0
      %p68 = por %p66, %p67
      %s70 = sadd.s32 %s69, 1
      %p73 = scmp.eq.s32.totalorder %s19, 1
      %p74 = scmp.ne.s32.totalorder %s69, %s71
      %p75 = scmp.eq.s32.totalorder %s19, 0
      %p76 = por %p74, %p75
      %p77 = scmp.ne.s32.totalorder %s69, %s71
      %p78 = scmp.eq.s32.totalorder %s24, 1
      %p79 = por %p77, %p78
      %p80 = scmp.ne.s32.totalorder %s71, %s72
      %p81 = scmp.eq.s32.totalorder %s24, 0
      %p82 = por %p80, %p81
      %p83 = scmp.ne.s32.totalorder %s71, %s72
      %p84 = scmp.eq.s32.totalorder %s25, 1
      %p85 = por %p83, %p84
      %p87 = scmp.ne.s32.totalorder %s72, %s86
      %p88 = scmp.eq.s32.totalorder %s25, 0
      %p89 = por %p87, %p88
      %s91 = sadd.s32 %s90, 1
      %p94 = scmp.eq.s32.totalorder %s19, 1
      %p95 = scmp.ne.s32.totalorder %s90, %s92
      %p96 = scmp.eq.s32.totalorder %s19, 0
      %p97 = por %p95, %p96
      %p98 = scmp.ne.s32.totalorder %s90, %s92
      %p99 = scmp.eq.s32.totalorder %s24, 1
      %p100 = por %p98, %p99
      %p101 = scmp.ne.s32.totalorder %s92, %s93
      %p102 = scmp.eq.s32.totalorder %s24, 0
      %p103 = por %p101, %p102
      %p104 = scmp.ne.s32.totalorder %s92, %s93
      %p105 = scmp.eq.s32.totalorder %s25, 1
      %p106 = por %p104, %p105
      %p108 = scmp.ne.s32.totalorder %s93, %s107
      %p109 = scmp.eq.s32.totalorder %s25, 0
      %p110 = por %p108, %p109
      %s112 = sadd.s32 %s111, 1
      %p115 = scmp.eq.s32.totalorder %s19, 1
      %p116 = scmp.ne.s32.totalorder %s111, %s113
      %p117 = scmp.eq.s32.totalorder %s19, 0
      %p118 = por %p116, %p117
      %p119 = scmp.ne.s32.totalorder %s111, %s113
      %p120 = scmp.eq.s32.totalorder %s24, 1
      %p121 = por %p119, %p120
      %p122 = scmp.ne.s32.totalorder %s113, %s114
      %p123 = scmp.eq.s32.totalorder %s24, 0
      %p124 = por %p122, %p123
      %p125 = scmp.ne.s32.totalorder %s113, %s114
      %p126 = scmp.eq.s32.totalorder %s25, 1
      %p127 = por %p125, %p126
      %p129 = scmp.ne.s32.totalorder %s114, %s128
      %p130 = scmp.eq.s32.totalorder %s25, 0
      %p131 = por %p129, %p130
      %s133 = sadd.s32 %s132, 1
      %p136 = scmp.eq.s32.totalorder %s19, 1
      %p137 = scmp.ne.s32.totalorder %s132, %s134
      %p138 = scmp.eq.s32.totalorder %s19, 0
      %p139 = por %p137, %p138
      %p140 = scmp.ne.s32.totalorder %s132, %s134
      %p141 = scmp.eq.s32.totalorder %s24, 1
      %p142 = por %p140, %p141
      %p143 = scmp.ne.s32.totalorder %s134, %s135
      %p144 = scmp.eq.s32.totalorder %s24, 0
      %p145 = por %p143, %p144
      %p146 = scmp.ne.s32.totalorder %s134, %s135
      %p147 = scmp.eq.s32.totalorder %s25, 1
      %p148 = por %p146, %p147
      %p150 = scmp.ne.s32.totalorder %s135, %s149
      %p151 = scmp.eq.s32.totalorder %s25, 0
      %p152 = por %p150, %p151
      %s154 = sadd.s32 %s153, 1
      %p157 = scmp.eq.s32.totalorder %s19, 1
      %p158 = scmp.ne.s32.totalorder %s153, %s155
      %p159 = scmp.eq.s32.totalorder %s19, 0
      %p160 = por %p158, %p159
      %p161 = scmp.ne.s32.totalorder %s153, %s155
      %p162 = scmp.eq.s32.totalorder %s24, 1
      %p163 = por %p161, %p162
      %p164 = scmp.ne.s32.totalorder %s155, %s156
      %p165 = scmp.eq.s32.totalorder %s24, 0
      %p166 = por %p164, %p165
      %p167 = scmp.ne.s32.totalorder %s155, %s156
      %p168 = scmp.eq.s32.totalorder %s25, 1
      %p169 = por %p167, %p168
      %p171 = scmp.ne.s32.totalorder %s156, %s170
      %p172 = scmp.eq.s32.totalorder %s25, 0
      %p173 = por %p171, %p172
      %s175 = sadd.s32 %s174, 1
      %p178 = scmp.eq.s32.totalorder %s19, 1
      %p179 = scmp.ne.s32.totalorder %s174, %s176
      %p180 = scmp.eq.s32.totalorder %s19, 0
      %p181 = por %p179, %p180
      %p182 = scmp.ne.s32.totalorder %s174, %s176
      %p183 = scmp.eq.s32.totalorder %s24, 1
      %p184 = por %p182, %p183
      %p185 = scmp.ne.s32.totalorder %s176, %s177
      %p186 = scmp.eq.s32.totalorder %s24, 0
      %p187 = por %p185, %p186
      %p188 = scmp.ne.s32.totalorder %s176, %s177
      %p189 = scmp.eq.s32.totalorder %s25, 1
      %p190 = por %p188, %p189
      %p192 = scmp.ne.s32.totalorder %s177, %s191
      %p193 = scmp.eq.s32.totalorder %s25, 0
      %p194 = por %p192, %p193
      %s195 = ssub.s32 %s19, %s26
      %p196 = scmp.eq.s32.totalorder %s195, 0
      %s198 = sadd.s32 %s197, 1
      %s199 = scalar_select %p196, %s197, %s198
      %p202 = pneg %p196
      %p203 = scmp.eq.s32.totalorder %s19, 1
      %p204 = por %p202, %p203
      %p205 = scmp.ne.s32.totalorder %s197, %s200
      %p206 = scmp.eq.s32.totalorder %s19, 0
      %p207 = por %p205, %p206
      %p208 = scmp.ne.s32.totalorder %s197, %s200
      %p209 = scmp.eq.s32.totalorder %s24, 1
      %p210 = por %p208, %p209
      %p211 = scmp.ne.s32.totalorder %s200, %s201
      %p212 = scmp.eq.s32.totalorder %s24, 0
      %p213 = por %p211, %p212
      %p214 = scmp.ne.s32.totalorder %s200, %s201
      %p215 = scmp.eq.s32.totalorder %s25, 1
      %p216 = por %p214, %p215
      %p218 = scmp.ne.s32.totalorder %s201, %s217
      %p219 = scmp.eq.s32.totalorder %s25, 0
      %p220 = por %p218, %p219
      %s221 = ssub.s32 %s19, %s26
      %p222 = scmp.eq.s32.totalorder %s221, 0
      %s224 = sadd.s32 %s223, 1
      %s225 = scalar_select %p222, %s223, %s224
      %p228 = pneg %p222
      %p229 = scmp.eq.s32.totalorder %s19, 1
      %p230 = por %p228, %p229
      %p231 = scmp.ne.s32.totalorder %s223, %s226
      %p232 = scmp.eq.s32.totalorder %s19, 0
      %p233 = por %p231, %p232
      %p234 = scmp.ne.s32.totalorder %s223, %s226
      %p235 = scmp.eq.s32.totalorder %s24, 1
      %p236 = por %p234, %p235
      %p237 = scmp.ne.s32.totalorder %s226, %s227
      %p238 = scmp.eq.s32.totalorder %s24, 0
      %p239 = por %p237, %p238
      %p240 = scmp.ne.s32.totalorder %s226, %s227
      %p241 = scmp.eq.s32.totalorder %s25, 1
      %p242 = por %p240, %p241
      %p244 = scmp.ne.s32.totalorder %s227, %s243
      %p245 = scmp.eq.s32.totalorder %s25, 0
      %p246 = por %p244, %p245
      %p247 = scmp.le.s32.totalorder 1, %s19
      %p248 = scmp.lt.s32.totalorder %s19, 3
      %p249 = pnand %p247, %p248
      %p250 = pneg %p249
      // Predicated region
      $region9: #{my_lr_2_forward.1} parent=5 // pred_check
        _
      $region10: #{my_lr_2_forward.1} parent=5 // pred_check_branch
        %252 = sbr.rel (%p249) target = $region12
      $region11: #{my_lr_2_forward.1} parent=5 // pred_region
        %s253 = ssub.s32 %s19, 1
        // Predicated region
        $region13: #{my_lr_2_forward.1} parent=11 // pred_check
          %p254 = pneg %p40
        $region14: #{my_lr_2_forward.1} parent=11 // pred_check_branch
          %256 = sbr.rel (%p254) target = $region16
        $region15: #{my_lr_2_forward.1} parent=11 // pred_region
          %258 = vsyncadd [#allocation5], 0
          %s260 = sshll.u32 %s0, 4
          %s261 = int_to_ptr.vmem [resolvable:$true] %s260
          %263 = dma.vmem_to_smem %s261, 16, [#allocation4], [#allocation5]
        $region16: #{my_lr_2_forward.1} parent=11 // pred_fallthru
          _
        // Predicated region
        $region17: #{my_lr_2_forward.1} parent=11 // pred_check
          %p264 = pneg %p61
        $region18: #{my_lr_2_forward.1} parent=11 // pred_check_branch
          %266 = sbr.rel (%p264) target = $region20
        $region19: #{my_lr_2_forward.1} parent=11 // pred_region
          _
        $region20: #{my_lr_2_forward.1} parent=11 // pred_fallthru
          _
        // Predicated region
        $region21: #{my_lr_2_forward.1} parent=11 // pred_check
          %p267 = pneg %p82
        $region22: #{my_lr_2_forward.1} parent=11 // pred_check_branch
          %269 = sbr.rel (%p267) target = $region24
        $region23: #{my_lr_2_forward.1} parent=11 // pred_region
          %271 = vsyncadd [#allocation7], 0
          %s273 = sshll.u32 %s2, 4
          %s274 = int_to_ptr.vmem [resolvable:$true] %s273
          %276 = dma.vmem_to_smem %s274, 16, [#allocation6], [#allocation7]
        $region24: #{my_lr_2_forward.1} parent=11 // pred_fallthru
          _
        // Predicated region
        $region25: #{my_lr_2_forward.1} parent=11 // pred_check
          %p277 = pneg %p103
        $region26: #{my_lr_2_forward.1} parent=11 // pred_check_branch
          %279 = sbr.rel (%p277) target = $region28
        $region27: #{my_lr_2_forward.1} parent=11 // pred_region
          _
        $region28: #{my_lr_2_forward.1} parent=11 // pred_fallthru
          _
        // Predicated region
        $region29: #{my_lr_2_forward.1} parent=11 // pred_check
          %p280 = pneg %p124
        $region30: #{my_lr_2_forward.1} parent=11 // pred_check_branch
          %282 = sbr.rel (%p280) target = $region32
        $region31: #{my_lr_2_forward.1} parent=11 // pred_region
          _
        $region32: #{my_lr_2_forward.1} parent=11 // pred_fallthru
          _
        // Predicated region
        $region33: #{my_lr_2_forward.1} parent=11 // pred_check
          %p283 = pneg %p145
        $region34: #{my_lr_2_forward.1} parent=11 // pred_check_branch
          %285 = sbr.rel (%p283) target = $region36
        $region35: #{my_lr_2_forward.1} parent=11 // pred_region
          _
        $region36: #{my_lr_2_forward.1} parent=11 // pred_fallthru
          _
        // Predicated region
        $region37: #{my_lr_2_forward.1} parent=11 // pred_check
          %p286 = pneg %p166
        $region38: #{my_lr_2_forward.1} parent=11 // pred_check_branch
          %288 = sbr.rel (%p286) target = $region40
        $region39: #{my_lr_2_forward.1} parent=11 // pred_region
          _
        $region40: #{my_lr_2_forward.1} parent=11 // pred_fallthru
          _
        // Predicated region
        $region41: #{my_lr_2_forward.1} parent=11 // pred_check
          %p289 = pneg %p187
        $region42: #{my_lr_2_forward.1} parent=11 // pred_check_branch
          %291 = sbr.rel (%p289) target = $region44
        $region43: #{my_lr_2_forward.1} parent=11 // pred_region
          _
        $region44: #{my_lr_2_forward.1} parent=11 // pred_fallthru
          _
      $region12: #{my_lr_2_forward.1} parent=5 // pred_fallthru
        _
      %p292 = scmp.lt.s32.totalorder %s19, 2
      // Predicated region
      $region45: #{my_lr_2_forward.1} parent=5 // pred_check
        %p293 = pneg %p292
      $region46: #{my_lr_2_forward.1} parent=5 // pred_check_branch
        %295 = sbr.rel (%p293) target = $region48
      $region47: #{my_lr_2_forward.1} parent=5 // pred_region
        // Predicated region
        $region49: #{my_lr_2_forward.1} parent=47 // pred_check
          %p296 = pneg %p207
        $region50: #{my_lr_2_forward.1} parent=47 // pred_check_branch
          %298 = sbr.rel (%p296) target = $region52
        $region51: #{my_lr_2_forward.1} parent=47 // pred_region
          %s299 = sand.u32 %s197, 1
          %s300 = sand.u32 %s197, 1
          %s301 = smul.addr %s300, 32
          %s302 = scalar_lea.vmem [#allocation8], %s301
          %s303 = smul.addr %s19, 8
          %s304 = scalar_lea.vmem %s8, %s303
          // Predicated region
          $region53: #{my_lr_2_forward.1} parent=51 // pred_check
            _
          $region54: #{my_lr_2_forward.1} parent=51 // pred_check_branch
            %306 = sbr.rel (0) target = $region56
          $region55: #{my_lr_2_forward.1} parent=51 // pred_region
            // Predicated region
            $region57: #{my_lr_2_forward.1} parent=55 // pred_check
              _
            $region58: #{my_lr_2_forward.1} parent=55 // pred_check_branch
              %308 = sbr.rel (0) target = $region60
            $region59: #{my_lr_2_forward.1} parent=55 // pred_region
              // Predicated region
              $region72: #{my_lr_2_forward.1} parent=59 // pred_check
                _
              $region73: #{my_lr_2_forward.1} parent=59 // pred_check_branch
                %330 = sbr.rel (0) target = $region75
              $region74: #{my_lr_2_forward.1} parent=59 // pred_region
                loop: start=0, step=1, limit=1
                $region76: #{my_lr_2_forward.1} parent=74 // loop_pre_header
                  _
                $region77: #{my_lr_2_forward.1} parent=74 // loop_header
                  %s332 = sphi 0, %s336
                  %p333 = scmp.ge.s32.totalorder %s332, 1
                  %s337 = sphi %s304, %s304
                  %s338 = sphi %s302, %s302
                $region78: #{my_lr_2_forward.1} parent=74 // loop_header_branch
                  %335 = sbr.rel (%p333) target = $region82
                $region79: #{my_lr_2_forward.1} parent=74 // loop_body
                  %v339 = vld [vmem:[%s337] sm:$0xff]
                  %340 = vst [vmem:[%s338] sm:$0xff] %v339
                  %v341 = vld [vmem:[%s337 + $0x10] sm:$0xff]
                  %342 = vst [vmem:[%s338 + $0x8] sm:$0xff] %v341
                  %v343 = vld [vmem:[%s337 + $0x20] sm:$0xff]
                  %344 = vst [vmem:[%s338 + $0x10] sm:$0xff] %v343
                  %v345 = vld [vmem:[%s337 + $0x30] sm:$0xff]
                  %346 = vst [vmem:[%s338 + $0x18] sm:$0xff] %v345
                $region80: #{my_lr_2_forward.1} parent=74 // loop_footer
                  %s336 = sadd.s32 1, %s332
                $region81: #{my_lr_2_forward.1} parent=74 // loop_footer_branch
                  %331 = sbr.rel target = $region77
                $region82: #{my_lr_2_forward.1} parent=74 // loop_exit
                  _
              $region75: #{my_lr_2_forward.1} parent=59 // pred_fallthru
                _
              // Predicated region
              $region83: #{my_lr_2_forward.1} parent=59 // pred_check
                _
              $region84: #{my_lr_2_forward.1} parent=59 // pred_check_branch
                %348 = sbr.rel target = $region86
              $region85: #{my_lr_2_forward.1} parent=59 // pred_region
                _
              $region86: #{my_lr_2_forward.1} parent=59 // pred_fallthru
                _
            $region60: #{my_lr_2_forward.1} parent=55 // pred_fallthru
              _
            // Predicated region
            $region61: #{my_lr_2_forward.1} parent=55 // pred_check
              _
            $region62: #{my_lr_2_forward.1} parent=55 // pred_check_branch
              %310 = sbr.rel target = $region64
            $region63: #{my_lr_2_forward.1} parent=55 // pred_region
              %s312 = ssub.s32 256, 1
              loop: start=0, step=1, limit=1
              $region65: #{my_lr_2_forward.1} parent=63 // loop_pre_header
                _
              $region66: #{my_lr_2_forward.1} parent=63 // loop_header
                %s314 = sphi 0, %s318
                %p315 = scmp.ge.s32.totalorder %s314, 1
                %s319 = sphi %s304, %s304
                %s320 = sphi %s302, %s302
              $region67: #{my_lr_2_forward.1} parent=63 // loop_header_branch
                %317 = sbr.rel (%p315) target = $region71
              $region68: #{my_lr_2_forward.1} parent=63 // loop_body
                %v321 = vld [vmem:[%s319] sm:%s312]
                %322 = vst [vmem:[%s320] sm:%s312] %v321
                %v323 = vld [vmem:[%s319 + $0x10] sm:%s312]
                %324 = vst [vmem:[%s320 + $0x8] sm:%s312] %v323
                %v325 = vld [vmem:[%s319 + $0x20] sm:%s312]
                %326 = vst [vmem:[%s320 + $0x10] sm:%s312] %v325
                %v327 = vld [vmem:[%s319 + $0x30] sm:%s312]
                %328 = vst [vmem:[%s320 + $0x18] sm:%s312] %v327
              $region69: #{my_lr_2_forward.1} parent=63 // loop_footer
                %s318 = sadd.s32 1, %s314
              $region70: #{my_lr_2_forward.1} parent=63 // loop_footer_branch
                %313 = sbr.rel target = $region66
              $region71: #{my_lr_2_forward.1} parent=63 // loop_exit
                _
            $region64: #{my_lr_2_forward.1} parent=55 // pred_fallthru
              _
          $region56: #{my_lr_2_forward.1} parent=51 // pred_fallthru
            _
          %349 = vnop
        $region52: #{my_lr_2_forward.1} parent=47 // pred_fallthru
          _
      $region48: #{my_lr_2_forward.1} parent=5 // pred_fallthru
        _
      %p350 = scmp.le.s32.totalorder 1, %s19
      %p351 = scmp.lt.s32.totalorder %s19, 3
      %p352 = pnand %p350, %p351
      %p353 = pneg %p352
      // Predicated region
      $region87: #{my_lr_2_forward.1} parent=5 // pred_check
        _
      $region88: #{my_lr_2_forward.1} parent=5 // pred_check_branch
        %355 = sbr.rel (%p352) target = $region90
      $region89: #{my_lr_2_forward.1} parent=5 // pred_region
        %s356 = ssub.s32 %s19, 1
        // Predicated region
        $region91: #{my_lr_2_forward.1} parent=89 // pred_check
          %p357 = pneg %p40
        $region92: #{my_lr_2_forward.1} parent=89 // pred_check_branch
          %359 = sbr.rel (%p357) target = $region94
        $region93: #{my_lr_2_forward.1} parent=89 // pred_region
          %361 = dma.done [#allocation5], 16
        $region94: #{my_lr_2_forward.1} parent=89 // pred_fallthru
          _
        // Predicated region
        $region95: #{my_lr_2_forward.1} parent=89 // pred_check
          %p362 = pneg %p82
        $region96: #{my_lr_2_forward.1} parent=89 // pred_check_branch
          %364 = sbr.rel (%p362) target = $region98
        $region97: #{my_lr_2_forward.1} parent=89 // pred_region
          %366 = dma.done [#allocation7], 16
        $region98: #{my_lr_2_forward.1} parent=89 // pred_fallthru
          _
        %s367 = sand.u32 %s200, 1
        %s368 = sand.u32 %s200, 1
        %s369 = smul.addr %s368, 32
        %s370 = scalar_lea.vmem [#allocation8], %s369
        // Predicated region
        $region99: #{my_lr_2_forward.1} parent=89 // pred_check
          %p371 = pneg %p213
        $region100: #{my_lr_2_forward.1} parent=89 // pred_check_branch
          %373 = sbr.rel (%p371) target = $region102
        $region101: #{my_lr_2_forward.1} parent=89 // pred_region
          _
        $region102: #{my_lr_2_forward.1} parent=89 // pred_fallthru
          _
        %374 = sfence
        %p375 = pneg %p40
        %p376 = pneg %p37
        %p377 = pneg %p61
        %p378 = pneg %p58
        %p379 = pneg %p82
        %p380 = pneg %p79
        %p381 = pneg %p103
        %p382 = pneg %p100
        %p383 = pneg %p124
        %p384 = pneg %p121
        %p385 = pneg %p145
        %p386 = pneg %p142
        %p387 = pneg %p166
        %p388 = pneg %p163
        %p389 = pneg %p187
        %p390 = pneg %p184
        %s391 = sand.u32 %s200, 1
        %s392 = sand.u32 %s200, 1
        %s393 = smul.addr %s392, 32
        %s394 = scalar_lea.vmem [#allocation8], %s393
        %p395 = pneg %p213
        %p396 = pneg %p210
        %p397 = pneg %p239
        %p398 = pneg %p236
        %p399 = scmp.lt.s32.totalorder %s24, 1
        %s400 = scalar_select %p399, %s24, 1
        %s401 = smul.addr %s400, 8
        %s402 = scalar_lea.vmem %s9, %s401
        %p403 = scmp.lt.s32.totalorder %s24, 1
        %s404 = scalar_select %p403, %s24, 1
        %s405 = smul.addr %s404, 8
        %s406 = scalar_lea.vmem %s9, %s405
        %v407 = vld [vmem:[%s6] sm:$0xff]
        %v408 = vld [vmem:[%s6 + $0x8] sm:$0xff]
        %v409 = vld [vmem:[%s6 + $0x10] sm:$0xff]
        %v410 = vld [vmem:[%s6 + $0x18] sm:$0xff]
        %v411 = vld [vmem:[%s7] sm:$0xff]
        %v412 = vld [vmem:[%s7 + $0x8] sm:$0xff]
        %v413 = vld [vmem:[%s7 + $0x10] sm:$0xff]
        %v414 = vld [vmem:[%s7 + $0x18] sm:$0xff]
        %v415 = vld [vmem:[%s370] sm:$0xff]
        %v416 = vld [vmem:[%s370 + $0x8] sm:$0xff]
        %v417 = vld [vmem:[%s370 + $0x10] sm:$0xff]
        %v418 = vld [vmem:[%s370 + $0x18] sm:$0xff]
        %v419 = vrot.slane %v415, 7
        %v420 = vrot.slane %v416, 7
        %v421 = vrot.slane %v417, 7
        %v422 = vrot.slane %v418, 7
        %v423 = vlaneseq
        %v424 = vshrl.u32 %v423, 7
        %vm425 = vcmp.lt.s32.totalorder %v424, 1
        %v426 = vsel %vm425, %v421, %v422
        %v427 = vsel %vm425, %v420, %v421
        %v428 = vsel %vm425, %v419, %v420
        %v429 = vsel %vm425, %v422, %v419
        %431 = vset.pattern.permute.xlu0 0
        %432 = vperm.xlu0 %431, %v407
        %v433 = vpop.permute.xlu0 %432
        %436 = vset.pattern.permute.xlu0 0
        %437 = vperm.xlu0 %436, %v408
        %v438 = vpop.permute.xlu0 %437
        %441 = vset.pattern.permute.xlu0 0
        %442 = vperm.xlu0 %441, %v409
        %v443 = vpop.permute.xlu0 %442
        %446 = vset.pattern.permute.xlu0 0
        %447 = vperm.xlu0 %446, %v410
        %v448 = vpop.permute.xlu0 %447
        %v450 = vmul.f32 %v429, %v433
        %v451 = vmul.f32 %v428, %v438
        %v452 = vmul.f32 %v427, %v443
        %v453 = vmul.f32 %v426, %v448
        %v454 = vrot.slane %v415, 1
        %v455 = vrot.slane %v416, 1
        %v456 = vrot.slane %v417, 1
        %v457 = vrot.slane %v418, 1
        %vm458 = vcmp.lt.s32.totalorder %v424, 7
        %v459 = vsel %vm458, %v456, %v457
        %v460 = vsel %vm458, %v455, %v456
        %v461 = vsel %vm458, %v454, %v455
        %v462 = vsel %vm458, %v457, %v454
        %464 = vset.pattern.permute.xlu0 0
        %465 = vperm.xlu0 %464, %v411
        %v466 = vpop.permute.xlu0 %465
        %469 = vset.pattern.permute.xlu0 0
        %470 = vperm.xlu0 %469, %v412
        %v471 = vpop.permute.xlu0 %470
        %474 = vset.pattern.permute.xlu0 0
        %475 = vperm.xlu0 %474, %v413
        %v476 = vpop.permute.xlu0 %475
        %479 = vset.pattern.permute.xlu0 0
        %480 = vperm.xlu0 %479, %v414
        %v481 = vpop.permute.xlu0 %480
        %v483 = vmul.f32 %v461, %v466
        %v484 = vmul.f32 %v460, %v471
        %v485 = vmul.f32 %v459, %v476
        %v486 = vmul.f32 %v462, %v481
        %s487 = sld [smem:[#allocation4]]
        %v488 = vstv %s487
        %v489 = vmul.f32 %v488, %v450
        %v490 = vmul.f32 %v488, %v451
        %v491 = vmul.f32 %v488, %v452
        %v492 = vmul.f32 %v488, %v453
        %s493 = sld [smem:[#allocation4 + $0x1]]
        %v494 = vstv %s493
        %v495 = vmul.f32 %v494, %v415
        %v496 = vmul.f32 %v494, %v416
        %v497 = vmul.f32 %v494, %v417
        %v498 = vmul.f32 %v494, %v418
        %v499 = vadd.f32 %v489, %v495
        %v500 = vadd.f32 %v490, %v496
        %v501 = vadd.f32 %v491, %v497
        %v502 = vadd.f32 %v492, %v498
        %s503 = sld [smem:[#allocation4 + $0x2]]
        %v504 = vstv %s503
        %v505 = vmul.f32 %v504, %v483
        %v506 = vmul.f32 %v504, %v484
        %v507 = vmul.f32 %v504, %v485
        %v508 = vmul.f32 %v504, %v486
        %v509 = vadd.f32 %v499, %v505
        %v510 = vadd.f32 %v500, %v506
        %v511 = vadd.f32 %v501, %v507
        %v512 = vadd.f32 %v502, %v508
        %s513 = sld [smem:[#allocation2]]
        %v514 = vstv %s513
        %v515 = vadd.f32 %v509, %v514
        %v516 = vadd.f32 %v510, %v514
        %v517 = vadd.f32 %v511, %v514
        %v518 = vadd.f32 %v512, %v514
        %vm519 = vcmp.gt.f32.partialorder %v515, 0.0
        %vm520 = vcmp.gt.f32.partialorder %v516, 0.0
        %vm521 = vcmp.gt.f32.partialorder %v517, 0.0
        %vm522 = vcmp.gt.f32.partialorder %v518, 0.0
        %v523 = vmul.f32 %v515, 0.2
        %v524 = vmul.f32 %v516, 0.2
        %v525 = vmul.f32 %v517, 0.2
        %v526 = vmul.f32 %v518, 0.2
        %v527 = vsel %vm519, %v515, %v523
        %v528 = vsel %vm520, %v516, %v524
        %v529 = vsel %vm521, %v517, %v525
        %v530 = vsel %vm522, %v518, %v526
        %v531 = vrot.slane %v527, 7
        %v532 = vrot.slane %v528, 7
        %v533 = vrot.slane %v529, 7
        %v534 = vrot.slane %v530, 7
        %v535 = vsel %vm425, %v533, %v534
        %v536 = vsel %vm425, %v532, %v533
        %v537 = vsel %vm425, %v531, %v532
        %v538 = vsel %vm425, %v534, %v531
        %v539 = vmul.f32 %v538, %v433
        %v540 = vmul.f32 %v537, %v438
        %v541 = vmul.f32 %v536, %v443
        %v542 = vmul.f32 %v535, %v448
        %v543 = vrot.slane %v527, 1
        %v544 = vrot.slane %v528, 1
        %v545 = vrot.slane %v529, 1
        %v546 = vrot.slane %v530, 1
        %v547 = vsel %vm458, %v545, %v546
        %v548 = vsel %vm458, %v544, %v545
        %v549 = vsel %vm458, %v543, %v544
        %v550 = vsel %vm458, %v546, %v543
        %v551 = vmul.f32 %v549, %v466
        %v552 = vmul.f32 %v548, %v471
        %v553 = vmul.f32 %v547, %v476
        %v554 = vmul.f32 %v550, %v481
        %s555 = sld [smem:[#allocation6]]
        %v556 = vstv %s555
        %v557 = vmul.f32 %v556, %v539
        %v558 = vmul.f32 %v556, %v540
        %v559 = vmul.f32 %v556, %v541
        %v560 = vmul.f32 %v556, %v542
        %s561 = sld [smem:[#allocation6 + $0x1]]
        %v562 = vstv %s561
        %v563 = vmul.f32 %v562, %v527
        %v564 = vmul.f32 %v562, %v528
        %v565 = vmul.f32 %v562, %v529
        %v566 = vmul.f32 %v562, %v530
        %v567 = vadd.f32 %v557, %v563
        %v568 = vadd.f32 %v558, %v564
        %v569 = vadd.f32 %v559, %v565
        %v570 = vadd.f32 %v560, %v566
        %s571 = sld [smem:[#allocation6 + $0x2]]
        %v572 = vstv %s571
        %v573 = vmul.f32 %v572, %v551
        %v574 = vmul.f32 %v572, %v552
        %v575 = vmul.f32 %v572, %v553
        %v576 = vmul.f32 %v572, %v554
        %v577 = vadd.f32 %v567, %v573
        %v578 = vadd.f32 %v568, %v574
        %v579 = vadd.f32 %v569, %v575
        %v580 = vadd.f32 %v570, %v576
        %s581 = sld [smem:[#allocation3]]
        %v582 = vstv %s581
        %v583 = vadd.f32 %v577, %v582
        %v584 = vadd.f32 %v578, %v582
        %v585 = vadd.f32 %v579, %v582
        %v586 = vadd.f32 %v580, %v582
        %vm587 = vcmp.gt.f32.partialorder %v583, 0.0
        %vm588 = vcmp.gt.f32.partialorder %v584, 0.0
        %vm589 = vcmp.gt.f32.partialorder %v585, 0.0
        %vm590 = vcmp.gt.f32.partialorder %v586, 0.0
        %v591 = vmul.f32 %v583, 0.2
        %v592 = vmul.f32 %v584, 0.2
        %v593 = vmul.f32 %v585, 0.2
        %v594 = vmul.f32 %v586, 0.2
        %v595 = vsel %vm587, %v583, %v591
        %v596 = vsel %vm588, %v584, %v592
        %v597 = vsel %vm589, %v585, %v593
        %v598 = vsel %vm590, %v586, %v594
        %v599 = vld [vmem:[%s4] sm:$0xff]
        %v600 = vld [vmem:[%s5] sm:$0xff]
        %602 = vset.pattern.permute.xlu0 0
        %603 = vperm.xlu0 %602, %v600
        %v604 = vpop.permute.xlu0 %603
        %vm606 = vcmask 261120
        %v608 = vsel %vm606, %v599, 0
        %610 = vmatpush.msra.mxu0 0.0
        %611 = vmatpush.msra.mxu0 0.0
        %612 = vmatpush.msra.mxu0 0.0
        %613 = vmatpush.msra.mxu0 0.0
        %614 = vmatpush.msra.mxu0 0.0
        %615 = vmatpush.msra.mxu0 0.0
        %616 = vmatpush.msra.mxu0 0.0
        %617 = vmatpush.msra.mxu0 0.0
        %618 = vmatpush.msra.mxu0 0.0
        %619 = vmatpush.msra.mxu0 0.0
        %620 = vmatpush.msra.mxu0 0.0
        %621 = vmatpush.msra.mxu0 0.0
        %622 = vmatpush.msra.mxu0 %v598
        %623 = vmatpush.msra.mxu0 %v597
        %624 = vmatpush.msra.mxu0 %v596
        %625 = vmatpush.msra.mxu0 %v595
        %626 = vmatmul.f32.gmra.mxu0 %v608
        %v627 = vpop.f32.mrf.mxu0
        %v628 = vadd.f32 %v604, %v627
        %629 = vdwg.mxu0
        %vm630 = vcmp.gt.f32.partialorder %v628, 0.0
        %v631 = vmul.f32 %v628, 0.2
        %v632 = vsel %vm630, %v628, %v631
        %v633 = vrot.slane %v632, 4
        %v634 = vmax.f32 %v632, %v633
        %v635 = vsub.f32 %v632, %v634
        %v636 = vmul.f32 %v635, 1.442695
        %v637 = vpow.pop %v636
        %v638 = vrot.slane %v637, 4
        %v639 = vadd.f32 %v637, %v638
        %v640 = vrcp.pop %v639
        %v641 = vmul.f32 %v637, %v640
        %642 = vst [vmem:[%s406] sm:$0xff] %v641
        %p643 = scmp.lt.s32.totalorder %s24, 1
        %s644 = scalar_select %p643, %s24, 1
        %s645 = smul.addr %s644, 8
        %s646 = scalar_lea.vmem %s9, %s645
        // Predicated region
        $region103: #{my_lr_2_forward.1} parent=89 // pred_check
          %p647 = pneg %p236
        $region104: #{my_lr_2_forward.1} parent=89 // pred_check_branch
          %649 = sbr.rel (%p647) target = $region106
        $region105: #{my_lr_2_forward.1} parent=89 // pred_region
          _
        $region106: #{my_lr_2_forward.1} parent=89 // pred_fallthru
          _
      $region90: #{my_lr_2_forward.1} parent=5 // pred_fallthru
        _
      %p650 = scmp.le.s32.totalorder 2, %s19
      // Predicated region
      $region107: #{my_lr_2_forward.1} parent=5 // pred_check
        %p651 = pneg %p650
      $region108: #{my_lr_2_forward.1} parent=5 // pred_check_branch
        %653 = sbr.rel (%p651) target = $region110
      $region109: #{my_lr_2_forward.1} parent=5 // pred_region
        %s654 = ssub.s32 %s19, 2
        // Predicated region
        $region111: #{my_lr_2_forward.1} parent=109 // pred_check
          %p655 = pneg %p242
        $region112: #{my_lr_2_forward.1} parent=109 // pred_check_branch
          %657 = sbr.rel (%p655) target = $region114
        $region113: #{my_lr_2_forward.1} parent=109 // pred_region
          %p658 = scmp.lt.s32.totalorder %s25, 1
          %s659 = scalar_select %p658, %s25, 1
          %s660 = smul.addr %s659, 8
          %s661 = scalar_lea.vmem %s9, %s660
        $region114: #{my_lr_2_forward.1} parent=109 // pred_fallthru
          _
      $region110: #{my_lr_2_forward.1} parent=5 // pred_fallthru
        _
    $region6: #{my_lr_2_forward.1} parent=1 // loop_footer
      %s23 = sadd.s32 1, %s19
    $region7: #{my_lr_2_forward.1} parent=1 // loop_footer_branch
      %18 = sbr.rel target = $region3
    $region8: #{my_lr_2_forward.1} parent=1 // loop_exit
      _
    %662 = vsyncpa [#allocation5], 1
    %s663 = scalar_lea.sflag [#allocation5], 1
    %664 = vsyncpa %s663, 1
    %665 = vsyncpa [#allocation7], 1

</llo_original>
